<compile_context>
chip_gen: v7x
topology: tpu7x:2x2x1
jax: 0.10.0
libtpu: 0.0.40
codegen_flags: <defaults>
</compile_context>

<pallas_src>
import jax
import jax.numpy as jnp
from jax.experimental import pallas as pl
from jax.experimental.pallas import tpu as pltpu

EMBED_DIM = 32
DEPTH = 8  # outstanding row-DMAs per table (power of two)


def recsys_kernel(users_sref, prods_sref,      # scalar prefetch (SMEM): (B,) int32 each
                  u_hbm, p_hbm,                # full embedding tables, left in HBM (ANY)
                  wu_ref, wp_ref,              # (1, 32) split Linear weight (VMEM, resident)
                  b_ref,                       # (1, 1) bias (SMEM)
                  out_ref,                     # (1, 1, tb) lane-dense output tile
                  u_scr, p_scr,                # (tb, 32) gather scratch buffers
                  sems):                       # DMA semaphores (2, DEPTH)
    tb = out_ref.shape[2]
    total = users_sref.shape[0]                # static: true batch size B
    base = pl.program_id(0) * tb
    n = jnp.minimum(tb, total - base)          # valid rows in this tile

    def start_row(r, slot):
        pltpu.make_async_copy(u_hbm.at[users_sref[base + r]],
                              u_scr.at[r], sems.at[0, slot]).start()
        pltpu.make_async_copy(p_hbm.at[prods_sref[base + r]],
                              p_scr.at[r], sems.at[1, slot]).start()

    def wait_row(r):
        slot = r & (DEPTH - 1)
        pltpu.make_async_copy(u_hbm.at[0], u_scr.at[r], sems.at[0, slot]).wait()
        pltpu.make_async_copy(p_hbm.at[0], p_scr.at[r], sems.at[1, slot]).wait()

    # Gather all valid rows of this tile, keeping up to DEPTH DMAs per table
    # in flight (slot-pooled semaphores; wait before reusing a slot).
    @pl.loop(0, n)
    def _(r):
        slot = r & (DEPTH - 1)

        @pl.when(r >= DEPTH)
        def _():
            wait_row(r - DEPTH)

        start_row(r, slot)

    # Drain the tail: the last min(n, DEPTH) row DMAs are still in flight.
    @pl.loop(0, jnp.minimum(n, DEPTH))
    def _(k):
        wait_row(n - 1 - k)

    # Linear(64, 1) over the whole tile with the concat folded away:
    #   out = w_u @ U^T + w_p @ P^T + b   -> lane-dense (1, tb)
    dn = (((1,), (1,)), ((), ()))
    val = jax.lax.dot_general(wu_ref[...], u_scr[...], dn,
                              preferred_element_type=jnp.float32)
    val = val + jax.lax.dot_general(wp_ref[...], p_scr[...], dn,
                                    preferred_element_type=jnp.float32)
    val = val + b_ref[0, 0]

    # Zero the padded lanes (stale scratch rows) and do ONE lane-dense store.
    lane = jax.lax.broadcasted_iota(jnp.int32, (1, tb), 1)
    out_ref[0] = jnp.where(lane < n, val, 0.0)


def recsys_forward(users, products, user_table, product_table, w, b, *, tb=512):
    """users, products: int arrays (B,).  user_table: (n_users, 32),
    product_table: (n_products, 32), w: (1, 64) PyTorch-layout Linear weight,
    b: (1,).  Returns (B, 1) float32."""
    B = int(users.shape[0])
    _, ed = user_table.shape

    # Lane-friendly tile size: multiple of 128, clamped to the padded batch.
    b_round = -(-B // 128) * 128
    tb = max(128, min(tb, 2048))
    tb = min(tb, b_round)
    tb = -(-tb // 128) * 128
    num_tiles = -(-B // tb)

    users_i = users.astype(jnp.int32)
    prods_i = products.astype(jnp.int32)

    u_tab = user_table.astype(jnp.float32)       # stays in HBM
    p_tab = product_table.astype(jnp.float32)    # stays in HBM

    # Split the Linear(64,1) weight -> no concat needed in the kernel.
    w_u = w[:, :ed].reshape(1, ed).astype(jnp.float32)
    w_p = w[:, ed:].reshape(1, ed).astype(jnp.float32)
    b2 = jnp.asarray(b, jnp.float32).reshape(1, 1)

    out3 = pl.pallas_call(
        recsys_kernel,
        out_shape=jax.ShapeDtypeStruct((num_tiles, 1, tb), jnp.float32),
        grid_spec=pltpu.PrefetchScalarGridSpec(
            num_scalar_prefetch=2,
            grid=(num_tiles,),
            in_specs=[
                # Embedding tables: raw HBM refs, rows gathered manually.
                pl.BlockSpec(memory_space=pl.ANY),
                pl.BlockSpec(memory_space=pl.ANY),
                # Split weights: constant index_map -> loaded once, resident.
                pl.BlockSpec((1, ed), lambda i, u, p: (0, 0)),
                pl.BlockSpec((1, ed), lambda i, u, p: (0, 0)),
                # Bias: scalar in SMEM.
                pl.BlockSpec(memory_space=pltpu.MemorySpace.SMEM),
            ],
            # One lane-dense (1, 1, tb) output block per tile.
            out_specs=pl.BlockSpec((1, 1, tb), lambda i, u, p: (i, 0, 0)),
            scratch_shapes=[
                pltpu.VMEM((tb, ed), jnp.float32),   # gathered user rows
                pltpu.VMEM((tb, ed), jnp.float32),   # gathered product rows
                pltpu.SemaphoreType.DMA((2, DEPTH)),
            ],
        ),
        compiler_params=pltpu.CompilerParams(
            dimension_semantics=("parallel",)),
    )(users_i, prods_i, u_tab, p_tab, w_u, w_p, b2)

    return out3.reshape(num_tiles * tb)[:B].reshape(B, 1)


def init_params(key, n_users, n_products):
    k0, k1, k2, k3 = jax.random.split(key, 4)
    # nn.Embedding default init: N(0, 1)
    user_table = jax.random.normal(k0, (n_users, EMBED_DIM), dtype=jnp.float32)
    product_table = jax.random.normal(k1, (n_products, EMBED_DIM), dtype=jnp.float32)
    # nn.Linear default init: U(-1/sqrt(fan_in), 1/sqrt(fan_in)), fan_in = 64
    bound = 1.0 / jnp.sqrt(2.0 * EMBED_DIM)
    w = jax.random.uniform(k2, (1, 2 * EMBED_DIM), dtype=jnp.float32,
                           minval=-bound, maxval=bound)  # PyTorch layout (out, in)
    b = jax.random.uniform(k3, (1,), dtype=jnp.float32,
                           minval=-bound, maxval=bound)
    return user_table, product_table, w, b


def reference_forward(users, products, user_table, product_table, w, b):
    ue = user_table[users]
    pe = product_table[products]
    feats = jnp.concatenate([ue, pe], axis=1)
    return feats @ w.T + b.reshape(1, 1)


if __name__ == "__main__":
    key = jax.random.PRNGKey(0)
    n_users, n_products, batch = 48, 64, 200   # 2 tiles of 128 -> exercises partial tile

    kp, ku, kprod = jax.random.split(key, 3)
    user_table, product_table, w, b = init_params(kp, n_users, n_products)

    users = jax.random.randint(ku, (batch,), 0, n_users, dtype=jnp.int32)
    products = jax.random.randint(kprod, (batch,), 0, n_products, dtype=jnp.int32)

    out = recsys_forward(users, products, user_table, product_table, w, b, tb=128)
    out = jax.block_until_ready(out)

    ref = reference_forward(users, products, user_table, product_table, w, b)
    assert out.shape == (batch, 1), out.shape
    assert jnp.allclose(out, ref, atol=1e-4, rtol=1e-4), (out, ref)
    print("KERNEL_OK")
</pallas_src>

<mosaic_0001>
module attributes {stable_mosaic.version = 11 : i64} {
  func.func @recsys_kernel(%arg0: i32, %arg1: memref<200xi32, #tpu.memory_space<smem>>, %arg2: memref<200xi32, #tpu.memory_space<smem>>, %arg3: memref<48x32xf32, #tpu.memory_space<any>>, %arg4: memref<64x32xf32, #tpu.memory_space<any>>, %arg5: memref<1x32xf32, #tpu.memory_space<vmem>>, %arg6: memref<1x32xf32, #tpu.memory_space<vmem>>, %arg7: memref<1x1xf32, #tpu.memory_space<smem>>, %arg8: memref<1x1x128xf32, #tpu.memory_space<vmem>>, %arg9: memref<128x32xf32, #tpu.memory_space<vmem>>, %arg10: memref<128x32xf32, #tpu.memory_space<vmem>>, %arg11: memref<2x8x!tpu.dma_semaphore, #tpu.memory_space<semaphore_mem>>) attributes {dimension_semantics = [#tpu.dimension_semantics<parallel>], iteration_bounds = array<i64: 2>, scalar_prefetch = 2 : i64, scratch_operands = 3 : i64, tpu.core_type = #tpu.core_type<tc>, window_params = [{}, {}, {pipeline_mode = #tpu.pipeline_mode<synchronous>, transform_indices = @transform_2, window_bounds = array<i64: 1, 32>}, {pipeline_mode = #tpu.pipeline_mode<synchronous>, transform_indices = @transform_3, window_bounds = array<i64: 1, 32>}, {transform_indices = @transform_4, window_bounds = array<i64: 1, 1>}, {transform_indices = @transform_5, window_bounds = array<i64: 1, 1, 128>}]} {
    %c128_i32 = arith.constant 128 : i32
    %0 = arith.muli %arg0, %c128_i32 : i32
    %c200_i32 = arith.constant 200 : i32
    %1 = arith.subi %c200_i32, %0 : i32
    %c128_i32_0 = arith.constant 128 : i32
    %2 = arith.minsi %c128_i32_0, %1 : i32
    %c0_i32 = arith.constant 0 : i32
    %3 = arith.subi %2, %c0_i32 : i32
    %c1_i32 = arith.constant 1 : i32
    %c1_i32_1 = arith.constant 1 : i32
    %4 = arith.subi %c1_i32, %c1_i32_1 : i32
    %5 = arith.addi %3, %4 : i32
    %c1_i32_2 = arith.constant 1 : i32
    %6 = arith.divsi %5, %c1_i32_2 : i32
    %c1_i32_3 = arith.constant 1 : i32
    %c0_i32_4 = arith.constant 0 : i32
    %c0_i32_5 = arith.constant 0 : i32
    %7 = arith.subi %6, %c0_i32_5 : i32
    %8 = arith.addi %c0_i32_5, %7 : i32
    %c1_i32_6 = arith.constant 1 : i32
    scf.for %arg12 = %c0_i32_5 to %8 step %c1_i32_6  : i32 {
      %34 = arith.muli %arg12, %c1_i32_3 : i32
      %35 = arith.addi %c0_i32_4, %34 : i32
      %c7_i32 = arith.constant 7 : i32
      %36 = arith.andi %35, %c7_i32 : i32
      %c8_i32_29 = arith.constant 8 : i32
      %37 = arith.cmpi sge, %35, %c8_i32_29 : i32
      %38 = arith.extui %37 : i1 to i32
      %c0_i32_30 = arith.constant 0 : i32
      %39 = arith.cmpi ne, %38, %c0_i32_30 : i32
      scf.if %39 {
        %c8_i32_37 = arith.constant 8 : i32
        %58 = arith.subi %35, %c8_i32_37 : i32
        %c7_i32_38 = arith.constant 7 : i32
        %59 = arith.andi %58, %c7_i32_38 : i32
        %c0_i32_39 = arith.constant 0 : i32
        %c0_i32_40 = arith.constant 0 : i32
        %c0_i32_41 = arith.constant 0 : i32
        %60 = tpu.memref_slice %arg3[%c0_i32_39, %c0_i32_41] : memref<48x32xf32, #tpu.memory_space<any>> -> memref<1x32xf32, #tpu.memory_space<any>>
        %61 = tpu.memref_squeeze %60 : memref<1x32xf32, #tpu.memory_space<any>> -> memref<32xf32, #tpu.memory_space<any>>
        %c0_i32_42 = arith.constant 0 : i32
        %62 = tpu.memref_slice %arg9[%58, %c0_i32_42] : memref<128x32xf32, #tpu.memory_space<vmem>> -> memref<1x32xf32, #tpu.memory_space<vmem>>
        %63 = tpu.memref_squeeze %62 : memref<1x32xf32, #tpu.memory_space<vmem>> -> memref<32xf32, #tpu.memory_space<vmem>>
        %64 = tpu.memref_slice %arg11[%c0_i32_40, %59] : memref<2x8x!tpu.dma_semaphore, #tpu.memory_space<semaphore_mem>> -> memref<1x1x!tpu.dma_semaphore, #tpu.memory_space<semaphore_mem>>
        %65 = tpu.memref_squeeze %64 : memref<1x1x!tpu.dma_semaphore, #tpu.memory_space<semaphore_mem>> -> memref<!tpu.dma_semaphore, #tpu.memory_space<semaphore_mem>>
        tpu.wait_dma2 semaphore(%65 : memref<!tpu.dma_semaphore, #tpu.memory_space<semaphore_mem>>) src(%61 : memref<32xf32, #tpu.memory_space<any>>) dst(%63 : memref<32xf32, #tpu.memory_space<vmem>>)
        %c0_i32_43 = arith.constant 0 : i32
        %c1_i32_44 = arith.constant 1 : i32
        %c0_i32_45 = arith.constant 0 : i32
        %66 = tpu.memref_slice %arg4[%c0_i32_43, %c0_i32_45] : memref<64x32xf32, #tpu.memory_space<any>> -> memref<1x32xf32, #tpu.memory_space<any>>
        %67 = tpu.memref_squeeze %66 : memref<1x32xf32, #tpu.memory_space<any>> -> memref<32xf32, #tpu.memory_space<any>>
        %c0_i32_46 = arith.constant 0 : i32
        %68 = tpu.memref_slice %arg10[%58, %c0_i32_46] : memref<128x32xf32, #tpu.memory_space<vmem>> -> memref<1x32xf32, #tpu.memory_space<vmem>>
        %69 = tpu.memref_squeeze %68 : memref<1x32xf32, #tpu.memory_space<vmem>> -> memref<32xf32, #tpu.memory_space<vmem>>
        %70 = tpu.memref_slice %arg11[%c1_i32_44, %59] : memref<2x8x!tpu.dma_semaphore, #tpu.memory_space<semaphore_mem>> -> memref<1x1x!tpu.dma_semaphore, #tpu.memory_space<semaphore_mem>>
        %71 = tpu.memref_squeeze %70 : memref<1x1x!tpu.dma_semaphore, #tpu.memory_space<semaphore_mem>> -> memref<!tpu.dma_semaphore, #tpu.memory_space<semaphore_mem>>
        tpu.wait_dma2 semaphore(%71 : memref<!tpu.dma_semaphore, #tpu.memory_space<semaphore_mem>>) src(%67 : memref<32xf32, #tpu.memory_space<any>>) dst(%69 : memref<32xf32, #tpu.memory_space<vmem>>)
      } else {
      }
      %40 = arith.addi %0, %35 : i32
      %41 = arith.index_cast %40 : i32 to index
      %42 = memref.load %arg1[%41] : memref<200xi32, #tpu.memory_space<smem>>
      %c0_i32_31 = arith.constant 0 : i32
      %c0_i32_32 = arith.constant 0 : i32
      %43 = tpu.memref_slice %arg3[%42, %c0_i32_32] : memref<48x32xf32, #tpu.memory_space<any>> -> memref<1x32xf32, #tpu.memory_space<any>>
      %44 = tpu.memref_squeeze %43 : memref<1x32xf32, #tpu.memory_space<any>> -> memref<32xf32, #tpu.memory_space<any>>
      %c0_i32_33 = arith.constant 0 : i32
      %45 = tpu.memref_slice %arg9[%35, %c0_i32_33] : memref<128x32xf32, #tpu.memory_space<vmem>> -> memref<1x32xf32, #tpu.memory_space<vmem>>
      %46 = tpu.memref_squeeze %45 : memref<1x32xf32, #tpu.memory_space<vmem>> -> memref<32xf32, #tpu.memory_space<vmem>>
      %47 = tpu.memref_slice %arg11[%c0_i32_31, %36] : memref<2x8x!tpu.dma_semaphore, #tpu.memory_space<semaphore_mem>> -> memref<1x1x!tpu.dma_semaphore, #tpu.memory_space<semaphore_mem>>
      %48 = tpu.memref_squeeze %47 : memref<1x1x!tpu.dma_semaphore, #tpu.memory_space<semaphore_mem>> -> memref<!tpu.dma_semaphore, #tpu.memory_space<semaphore_mem>>
      tpu.enqueue_dma source(%44 : memref<32xf32, #tpu.memory_space<any>>) target(%46 : memref<32xf32, #tpu.memory_space<vmem>>) target_semaphore(%48 : memref<!tpu.dma_semaphore, #tpu.memory_space<semaphore_mem>>)
      %49 = arith.addi %0, %35 : i32
      %50 = arith.index_cast %49 : i32 to index
      %51 = memref.load %arg2[%50] : memref<200xi32, #tpu.memory_space<smem>>
      %c1_i32_34 = arith.constant 1 : i32
      %c0_i32_35 = arith.constant 0 : i32
      %52 = tpu.memref_slice %arg4[%51, %c0_i32_35] : memref<64x32xf32, #tpu.memory_space<any>> -> memref<1x32xf32, #tpu.memory_space<any>>
      %53 = tpu.memref_squeeze %52 : memref<1x32xf32, #tpu.memory_space<any>> -> memref<32xf32, #tpu.memory_space<any>>
      %c0_i32_36 = arith.constant 0 : i32
      %54 = tpu.memref_slice %arg10[%35, %c0_i32_36] : memref<128x32xf32, #tpu.memory_space<vmem>> -> memref<1x32xf32, #tpu.memory_space<vmem>>
      %55 = tpu.memref_squeeze %54 : memref<1x32xf32, #tpu.memory_space<vmem>> -> memref<32xf32, #tpu.memory_space<vmem>>
      %56 = tpu.memref_slice %arg11[%c1_i32_34, %36] : memref<2x8x!tpu.dma_semaphore, #tpu.memory_space<semaphore_mem>> -> memref<1x1x!tpu.dma_semaphore, #tpu.memory_space<semaphore_mem>>
      %57 = tpu.memref_squeeze %56 : memref<1x1x!tpu.dma_semaphore, #tpu.memory_space<semaphore_mem>> -> memref<!tpu.dma_semaphore, #tpu.memory_space<semaphore_mem>>
      tpu.enqueue_dma source(%53 : memref<32xf32, #tpu.memory_space<any>>) target(%55 : memref<32xf32, #tpu.memory_space<vmem>>) target_semaphore(%57 : memref<!tpu.dma_semaphore, #tpu.memory_space<semaphore_mem>>)
    }
    %c8_i32 = arith.constant 8 : i32
    %9 = arith.minsi %2, %c8_i32 : i32
    %c0_i32_7 = arith.constant 0 : i32
    %10 = arith.subi %9, %c0_i32_7 : i32
    %c1_i32_8 = arith.constant 1 : i32
    %c1_i32_9 = arith.constant 1 : i32
    %11 = arith.subi %c1_i32_8, %c1_i32_9 : i32
    %12 = arith.addi %10, %11 : i32
    %c1_i32_10 = arith.constant 1 : i32
    %13 = arith.divsi %12, %c1_i32_10 : i32
    %c1_i32_11 = arith.constant 1 : i32
    %c0_i32_12 = arith.constant 0 : i32
    %c0_i32_13 = arith.constant 0 : i32
    %14 = arith.subi %13, %c0_i32_13 : i32
    %15 = arith.addi %c0_i32_13, %14 : i32
    %c1_i32_14 = arith.constant 1 : i32
    scf.for %arg12 = %c0_i32_13 to %15 step %c1_i32_14  : i32 {
      %34 = arith.muli %arg12, %c1_i32_11 : i32
      %35 = arith.addi %c0_i32_12, %34 : i32
      %c1_i32_29 = arith.constant 1 : i32
      %36 = arith.subi %2, %c1_i32_29 : i32
      %37 = arith.subi %36, %35 : i32
      %c7_i32 = arith.constant 7 : i32
      %38 = arith.andi %37, %c7_i32 : i32
      %c0_i32_30 = arith.constant 0 : i32
      %c0_i32_31 = arith.constant 0 : i32
      %c0_i32_32 = arith.constant 0 : i32
      %39 = tpu.memref_slice %arg3[%c0_i32_30, %c0_i32_32] : memref<48x32xf32, #tpu.memory_space<any>> -> memref<1x32xf32, #tpu.memory_space<any>>
      %40 = tpu.memref_squeeze %39 : memref<1x32xf32, #tpu.memory_space<any>> -> memref<32xf32, #tpu.memory_space<any>>
      %c0_i32_33 = arith.constant 0 : i32
      %41 = tpu.memref_slice %arg9[%37, %c0_i32_33] : memref<128x32xf32, #tpu.memory_space<vmem>> -> memref<1x32xf32, #tpu.memory_space<vmem>>
      %42 = tpu.memref_squeeze %41 : memref<1x32xf32, #tpu.memory_space<vmem>> -> memref<32xf32, #tpu.memory_space<vmem>>
      %43 = tpu.memref_slice %arg11[%c0_i32_31, %38] : memref<2x8x!tpu.dma_semaphore, #tpu.memory_space<semaphore_mem>> -> memref<1x1x!tpu.dma_semaphore, #tpu.memory_space<semaphore_mem>>
      %44 = tpu.memref_squeeze %43 : memref<1x1x!tpu.dma_semaphore, #tpu.memory_space<semaphore_mem>> -> memref<!tpu.dma_semaphore, #tpu.memory_space<semaphore_mem>>
      tpu.wait_dma2 semaphore(%44 : memref<!tpu.dma_semaphore, #tpu.memory_space<semaphore_mem>>) src(%40 : memref<32xf32, #tpu.memory_space<any>>) dst(%42 : memref<32xf32, #tpu.memory_space<vmem>>)
      %c0_i32_34 = arith.constant 0 : i32
      %c1_i32_35 = arith.constant 1 : i32
      %c0_i32_36 = arith.constant 0 : i32
      %45 = tpu.memref_slice %arg4[%c0_i32_34, %c0_i32_36] : memref<64x32xf32, #tpu.memory_space<any>> -> memref<1x32xf32, #tpu.memory_space<any>>
      %46 = tpu.memref_squeeze %45 : memref<1x32xf32, #tpu.memory_space<any>> -> memref<32xf32, #tpu.memory_space<any>>
      %c0_i32_37 = arith.constant 0 : i32
      %47 = tpu.memref_slice %arg10[%37, %c0_i32_37] : memref<128x32xf32, #tpu.memory_space<vmem>> -> memref<1x32xf32, #tpu.memory_space<vmem>>
      %48 = tpu.memref_squeeze %47 : memref<1x32xf32, #tpu.memory_space<vmem>> -> memref<32xf32, #tpu.memory_space<vmem>>
      %49 = tpu.memref_slice %arg11[%c1_i32_35, %38] : memref<2x8x!tpu.dma_semaphore, #tpu.memory_space<semaphore_mem>> -> memref<1x1x!tpu.dma_semaphore, #tpu.memory_space<semaphore_mem>>
      %50 = tpu.memref_squeeze %49 : memref<1x1x!tpu.dma_semaphore, #tpu.memory_space<semaphore_mem>> -> memref<!tpu.dma_semaphore, #tpu.memory_space<semaphore_mem>>
      tpu.wait_dma2 semaphore(%50 : memref<!tpu.dma_semaphore, #tpu.memory_space<semaphore_mem>>) src(%46 : memref<32xf32, #tpu.memory_space<any>>) dst(%48 : memref<32xf32, #tpu.memory_space<vmem>>)
    }
    %c0 = arith.constant 0 : index
    %c0_15 = arith.constant 0 : index
    %16 = vector.load %arg5[%c0, %c0_15] : memref<1x32xf32, #tpu.memory_space<vmem>>, vector<1x32xf32>
    %c0_16 = arith.constant 0 : index
    %c0_17 = arith.constant 0 : index
    %17 = vector.load %arg9[%c0_16, %c0_17] : memref<128x32xf32, #tpu.memory_space<vmem>>, vector<128x32xf32>
    %cst = arith.constant dense<0.000000e+00> : vector<1x128xf32>
    %18 = tpu.matmul %16, %17, %cst {dimension_numbers = #tpu.dot_dimension_numbers<[1], [1], [0], [0], [0, 0, 1, 0], [], []>} : vector<1x32xf32>, vector<128x32xf32>, vector<1x128xf32> -> vector<1x128xf32>
    %c0_18 = arith.constant 0 : index
    %c0_19 = arith.constant 0 : index
    %19 = vector.load %arg6[%c0_18, %c0_19] : memref<1x32xf32, #tpu.memory_space<vmem>>, vector<1x32xf32>
    %c0_20 = arith.constant 0 : index
    %c0_21 = arith.constant 0 : index
    %20 = vector.load %arg10[%c0_20, %c0_21] : memref<128x32xf32, #tpu.memory_space<vmem>>, vector<128x32xf32>
    %cst_22 = arith.constant dense<0.000000e+00> : vector<1x128xf32>
    %21 = tpu.matmul %19, %20, %cst_22 {dimension_numbers = #tpu.dot_dimension_numbers<[1], [1], [0], [0], [0, 0, 1, 0], [], []>} : vector<1x32xf32>, vector<128x32xf32>, vector<1x128xf32> -> vector<1x128xf32>
    %22 = arith.addf %18, %21 : vector<1x128xf32>
    %c0_23 = arith.constant 0 : index
    %c0_24 = arith.constant 0 : index
    %23 = memref.load %arg7[%c0_23, %c0_24] : memref<1x1xf32, #tpu.memory_space<smem>>
    %24 = vector.broadcast %23 : f32 to vector<1x128xf32>
    %25 = arith.addf %22, %24 : vector<1x128xf32>
    %26 = tpu.iota {dimensions = array<i32: 1>} : vector<1x128xi32>
    %27 = vector.broadcast %2 : i32 to vector<1x128xi32>
    %28 = arith.cmpi slt, %26, %27 : vector<1x128xi32>
    %cst_25 = arith.constant 0.000000e+00 : f32
    %29 = vector.broadcast %cst_25 : f32 to vector<1x128xf32>
    %30 = arith.select %28, %25, %29 : vector<1x128xi1>, vector<1x128xf32>
    %c0_26 = arith.constant 0 : index
    %c0_27 = arith.constant 0 : index
    %c0_28 = arith.constant 0 : index
    %31 = vector.load %arg8[%c0_26, %c0_27, %c0_28] : memref<1x1x128xf32, #tpu.memory_space<vmem>>, vector<1x1x128xf32>
    %32 = vector.shape_cast %31 : vector<1x1x128xf32> to vector<1x128xf32>
    %33 = vector.shape_cast %30 : vector<1x128xf32> to vector<1x1x128xf32>
    tpu.vector_store %arg8[%c0_26, %c0_27, %c0_28], %33 {strides = array<i32>} : memref<1x1x128xf32, #tpu.memory_space<vmem>>, vector<1x1x128xf32>,
    return
  }
  func.func @transform_2(%arg0: i32, %arg1: memref<200xi32, #tpu.memory_space<smem>>, %arg2: memref<200xi32, #tpu.memory_space<smem>>) -> (i32, i32) {
    %c0_i32 = arith.constant 0 : i32
    %c0_i32_0 = arith.constant 0 : i32
    %c0_i32_1 = arith.constant 0 : i32
    return %c0_i32, %c0_i32_0 : i32, i32
  }
  func.func @transform_3(%arg0: i32, %arg1: memref<200xi32, #tpu.memory_space<smem>>, %arg2: memref<200xi32, #tpu.memory_space<smem>>) -> (i32, i32) {
    %c0_i32 = arith.constant 0 : i32
    %c0_i32_0 = arith.constant 0 : i32
    %c0_i32_1 = arith.constant 0 : i32
    return %c0_i32, %c0_i32_0 : i32, i32
  }
  func.func @transform_4(%arg0: i32, %arg1: memref<200xi32, #tpu.memory_space<smem>>, %arg2: memref<200xi32, #tpu.memory_space<smem>>) -> (i32, i32) {
    %c0_i32 = arith.constant 0 : i32
    %c0_i32_0 = arith.constant 0 : i32
    %c0_i32_1 = arith.constant 0 : i32
    return %c0_i32, %c0_i32_0 : i32, i32
  }
  func.func @transform_5(%arg0: i32, %arg1: memref<200xi32, #tpu.memory_space<smem>>, %arg2: memref<200xi32, #tpu.memory_space<smem>>) -> (i32, i32, i32) {
    %c0_i32 = arith.constant 0 : i32
    %c0_i32_0 = arith.constant 0 : i32
    %c0_i32_1 = arith.constant 0 : i32
    return %arg0, %c0_i32, %c0_i32_0 : i32, i32, i32
  }
}

</mosaic_0001>

<llo_original>
// kernel: tpu_custom_call.1
$region0: #{tpu_custom_call.1}
  #allocation0 [shape = 'u32[]', space=smem, size = 0x4, offset = 0x4, fixed_abs, tag = 'smem constant byte address 0x4 - core index']
  #allocation1 [shape = 'u32[144,128]{1,0:T(1,128)}', space=vmem, size = 0x12000, scoped, tag = 'internal scratch']
  #allocation2 [shape = 'f32[128,32]{1,0:T(8,128)}', space=vmem, size = 0x10000, scoped, tag = 'scratch operand']
  #allocation3 [shape = 'f32[128,32]{1,0:T(8,128)}', space=vmem, size = 0x10000, scoped, tag = 'scratch operand']
  #allocation4 [shape = 's32[16]{0}', space=sflag, size = 0x40, scoped, tag = 'scratch operand']
  #allocation5 [shape = 's32[1]{0}', space=sflag, size = 0x4, scoped, tag = 'scoped memory for tpu_custom_call.1']
  #allocation6 [shape = 'u8[1024]{0}', space=smem, size = 0x400, scoped, tag = 'prefetched SMEM operand 0']
  #allocation7 [shape = 'u8[1024]{0}', space=smem, size = 0x400, scoped, tag = 'prefetched SMEM operand 1']
  #allocation8 [shape = 'f32[1,1]{1,0:T(1,128)S(6)}', space=smem, size = 0x200, scoped, tag = 'scoped memory for tpu_custom_call.1']
  #allocation11 [shape = 's32[]', space=sflag, size = 0x4, offset = 0, fixed_abs, tag = 'sflag constant byte address 0x0 - dummy sync flag']
  #allocation12 [shape = 's32[]', space=sflag, size = 0x4, offset = 0, fixed_abs, tag = 'sflag constant byte address 0x0 - dummy sync flag']
  %s0 = inlined_call_operand.vmem [shape: s32[200], index: 0, kind: input, shape index: {}]
  %s1 = inlined_call_operand.vmem [shape: s32[200], index: 1, kind: input, shape index: {}]
  %s2 = inlined_call_operand.vmem [shape: f32[48,32], index: 2, kind: input, shape index: {}]
  %s3 = inlined_call_operand.vmem [shape: f32[64,32], index: 3, kind: input, shape index: {}]
  %s4 = inlined_call_operand.vmem [shape: f32[1,32], index: 4, kind: input, shape index: {}]
  %s5 = inlined_call_operand.vmem [shape: f32[1,32], index: 5, kind: input, shape index: {}]
  %s6 = inlined_call_operand.<no memory space> [shape: f32[1,1], index: 6, kind: input, shape index: {}]
  %s7 = inlined_call_operand.hbm [shape: f32[2,1,128], index: 7, kind: output, shape index: {}]
  %s8 = sld [smem:[#allocation0]]
  $region123: #{tpu_custom_call.1} parent=0
    _
  %s10 = ssub.s32 1, %s8
  %s11 = scalar_select 0, %s10, %s8
  %s12 = sshll.u32 %s0, 4
  %s13 = int_to_ptr.vmem [resolvable:$true] %s12
  %15 = dma.vmem_to_smem %s13, 32, [#allocation6], [#allocation5]
  %s16 = sshll.u32 %s1, 4
  %s17 = int_to_ptr.vmem [resolvable:$true] %s16
  %19 = dma.vmem_to_smem %s17, 32, [#allocation7], [#allocation5]
  %20 = sst [smem:[#allocation8]] %s6
  %21 = dma.done [#allocation5], 64
  %22 = sfence
  $region1: #{tpu_custom_call.1} parent=0
    #allocation9 [shape = 'u8[1024]{0}', space=vmem, size = 0x400, scoped, tag = 'output window, operand 0']
    #allocation10 [shape = 's32[2]{0}', space=sflag, size = 0x8, scoped, tag = 'scoped memory for tpu_custom_call.1']
    %23 = vsyncpa [#allocation10], 0
    %s24 = scalar_lea.sflag [#allocation10], 1
    %25 = vsyncpa %s24, 0
    loop: start=0, step=1, limit=4
    $region2: #{tpu_custom_call.1} parent=1 // loop_pre_header
      _
    $region3: #{tpu_custom_call.1} parent=1 // loop_header
      %s27 = sphi 0, %s31
      %p28 = scmp.ge.s32.totalorder %s27, 4
      %s35 = sphi 0, %s35
      %s37 = sphi 0, %s35
      %s38 = sphi 0, %s37
      %s52 = sphi 0, %s38
      %s56 = sphi 0, %s56
      %s58 = sphi 0, %s56
      %s59 = sphi 0, %s58
      %s73 = sphi 0, %s59
      %s77 = sphi 0, %s77
      %s79 = sphi 0, %s77
      %s80 = sphi 0, %s79
      %s94 = sphi 0, %s80
      %s100 = sphi 0, %s102
      %s103 = sphi 0, %s100
      %s104 = sphi 0, %s103
      %s120 = sphi 0, %s104
    $region4: #{tpu_custom_call.1} parent=1 // loop_header_branch
      %30 = sbr.rel (%p28) target = $region8
    $region5: #{tpu_custom_call.1} parent=1 // loop_body
      %s32 = ssub.s32 %s27, 1
      %s33 = ssub.s32 %s27, 2
      %s34 = sadd.s32 %s27, 1
      %s36 = sadd.s32 %s35, 1
      %p39 = scmp.eq.s32.totalorder %s27, 1
      %p40 = scmp.ne.s32.totalorder %s35, %s37
      %p41 = scmp.eq.s32.totalorder %s27, 0
      %p42 = por %p40, %p41
      %p43 = scmp.ne.s32.totalorder %s35, %s37
      %p44 = scmp.eq.s32.totalorder %s32, 1
      %p45 = por %p43, %p44
      %p46 = scmp.ne.s32.totalorder %s37, %s38
      %p47 = scmp.eq.s32.totalorder %s32, 0
      %p48 = por %p46, %p47
      %p49 = scmp.ne.s32.totalorder %s37, %s38
      %p50 = scmp.eq.s32.totalorder %s33, 1
      %p51 = por %p49, %p50
      %p53 = scmp.ne.s32.totalorder %s38, %s52
      %p54 = scmp.eq.s32.totalorder %s33, 0
      %p55 = por %p53, %p54
      %s57 = sadd.s32 %s56, 1
      %p60 = scmp.eq.s32.totalorder %s27, 1
      %p61 = scmp.ne.s32.totalorder %s56, %s58
      %p62 = scmp.eq.s32.totalorder %s27, 0
      %p63 = por %p61, %p62
      %p64 = scmp.ne.s32.totalorder %s56, %s58
      %p65 = scmp.eq.s32.totalorder %s32, 1
      %p66 = por %p64, %p65
      %p67 = scmp.ne.s32.totalorder %s58, %s59
      %p68 = scmp.eq.s32.totalorder %s32, 0
      %p69 = por %p67, %p68
      %p70 = scmp.ne.s32.totalorder %s58, %s59
      %p71 = scmp.eq.s32.totalorder %s33, 1
      %p72 = por %p70, %p71
      %p74 = scmp.ne.s32.totalorder %s59, %s73
      %p75 = scmp.eq.s32.totalorder %s33, 0
      %p76 = por %p74, %p75
      %s78 = sadd.s32 %s77, 1
      %p81 = scmp.eq.s32.totalorder %s27, 1
      %p82 = scmp.ne.s32.totalorder %s77, %s79
      %p83 = scmp.eq.s32.totalorder %s27, 0
      %p84 = por %p82, %p83
      %p85 = scmp.ne.s32.totalorder %s77, %s79
      %p86 = scmp.eq.s32.totalorder %s32, 1
      %p87 = por %p85, %p86
      %p88 = scmp.ne.s32.totalorder %s79, %s80
      %p89 = scmp.eq.s32.totalorder %s32, 0
      %p90 = por %p88, %p89
      %p91 = scmp.ne.s32.totalorder %s79, %s80
      %p92 = scmp.eq.s32.totalorder %s33, 1
      %p93 = por %p91, %p92
      %p95 = scmp.ne.s32.totalorder %s80, %s94
      %p96 = scmp.eq.s32.totalorder %s33, 0
      %p97 = por %p95, %p96
      %s98 = ssub.s32 %s27, %s34
      %p99 = scmp.eq.s32.totalorder %s98, 0
      %s101 = sadd.s32 %s100, 1
      %s102 = scalar_select %p99, %s100, %s101
      %p105 = pneg %p99
      %p106 = scmp.eq.s32.totalorder %s27, 1
      %p107 = por %p105, %p106
      %p108 = scmp.ne.s32.totalorder %s100, %s103
      %p109 = scmp.eq.s32.totalorder %s27, 0
      %p110 = por %p108, %p109
      %p111 = scmp.ne.s32.totalorder %s100, %s103
      %p112 = scmp.eq.s32.totalorder %s32, 1
      %p113 = por %p111, %p112
      %p114 = scmp.ne.s32.totalorder %s103, %s104
      %p115 = scmp.eq.s32.totalorder %s32, 0
      %p116 = por %p114, %p115
      %p117 = scmp.ne.s32.totalorder %s103, %s104
      %p118 = scmp.eq.s32.totalorder %s33, 1
      %p119 = por %p117, %p118
      %p121 = scmp.ne.s32.totalorder %s104, %s120
      %p122 = scmp.eq.s32.totalorder %s33, 0
      %p123 = por %p121, %p122
      %p124 = scmp.le.s32.totalorder 1, %s27
      %p125 = scmp.lt.s32.totalorder %s27, 3
      %p126 = pnand %p124, %p125
      %p127 = pneg %p126
      // Predicated region
      $region9: #{tpu_custom_call.1} parent=5 // pred_check
        _
      $region10: #{tpu_custom_call.1} parent=5 // pred_check_branch
        %129 = sbr.rel (%p126) target = $region12
      $region11: #{tpu_custom_call.1} parent=5 // pred_region
        %s130 = ssub.s32 %s27, 1
        // Predicated region
        $region13: #{tpu_custom_call.1} parent=11 // pred_check
          %p131 = pneg %p48
        $region14: #{tpu_custom_call.1} parent=11 // pred_check_branch
          %133 = sbr.rel (%p131) target = $region16
        $region15: #{tpu_custom_call.1} parent=11 // pred_region
          _
        $region16: #{tpu_custom_call.1} parent=11 // pred_fallthru
          _
        // Predicated region
        $region17: #{tpu_custom_call.1} parent=11 // pred_check
          %p134 = pneg %p69
        $region18: #{tpu_custom_call.1} parent=11 // pred_check_branch
          %136 = sbr.rel (%p134) target = $region20
        $region19: #{tpu_custom_call.1} parent=11 // pred_region
          _
        $region20: #{tpu_custom_call.1} parent=11 // pred_fallthru
          _
        // Predicated region
        $region21: #{tpu_custom_call.1} parent=11 // pred_check
          %p137 = pneg %p90
        $region22: #{tpu_custom_call.1} parent=11 // pred_check_branch
          %139 = sbr.rel (%p137) target = $region24
        $region23: #{tpu_custom_call.1} parent=11 // pred_region
          _
        $region24: #{tpu_custom_call.1} parent=11 // pred_fallthru
          _
      $region12: #{tpu_custom_call.1} parent=5 // pred_fallthru
        _
      %p140 = scmp.lt.s32.totalorder %s27, 2
      // Predicated region
      $region25: #{tpu_custom_call.1} parent=5 // pred_check
        %p141 = pneg %p140
      $region26: #{tpu_custom_call.1} parent=5 // pred_check_branch
        %143 = sbr.rel (%p141) target = $region28
      $region27: #{tpu_custom_call.1} parent=5 // pred_region
        _
      $region28: #{tpu_custom_call.1} parent=5 // pred_fallthru
        _
      %p144 = scmp.le.s32.totalorder 1, %s27
      %p145 = scmp.lt.s32.totalorder %s27, 3
      %p146 = pnand %p144, %p145
      %p147 = pneg %p146
      // Predicated region
      $region29: #{tpu_custom_call.1} parent=5 // pred_check
        _
      $region30: #{tpu_custom_call.1} parent=5 // pred_check_branch
        %149 = sbr.rel (%p146) target = $region32
      $region31: #{tpu_custom_call.1} parent=5 // pred_region
        %s150 = ssub.s32 %s27, 1
        %p151 = pneg %p48
        %p152 = pneg %p45
        %p153 = pneg %p69
        %p154 = pneg %p66
        %p155 = pneg %p90
        %p156 = pneg %p87
        %p157 = pneg %p116
        %p158 = pneg %p113
        %s159 = sand.u32 %s103, 1
        %s160 = scalar_lea.sflag [#allocation10], %s159
        %s161 = sand.u32 %s103, 1
        %s162 = scalar_lea.vmem [#allocation9], %s161
        %s163 = smul.u32 %s32, 128
        %s164 = ssub.s32 200, %s163
        %p165 = scmp.lt.s32.totalorder %s164, 128
        %s166 = scalar_select %p165, %s164, 128
        // While loop
        $region33: #{tpu_custom_call.1} parent=31 // loop_pre_header
          _
        $region34: #{tpu_custom_call.1} parent=31 // loop_header
          %s168 = sphi 0, %s170
          %p169 = scmp.ge.s32.totalorder %s168, %s166
        $region35: #{tpu_custom_call.1} parent=31 // loop_header_branch
          %172 = sbr.rel (%p169) target = $region39
        $region36: #{tpu_custom_call.1} parent=31 // loop_body
          %s173 = sand.u32 %s168, 7
          %p174 = scmp.ge.s32.totalorder %s168, 8
          // Predicated region
          $region40: #{tpu_custom_call.1} parent=36 // pred_check
            %p175 = pneg %p174
          $region41: #{tpu_custom_call.1} parent=36 // pred_check_branch
            %177 = sbr.rel (%p175) target = $region43
          $region42: #{tpu_custom_call.1} parent=36 // pred_region
            %s178 = ssub.s32 %s168, 8
            %s179 = sand.u32 %s178, 7
            %s180 = scalar_lea.sflag [#allocation4], %s179
            %182 = dma.done %s180, 16
            %s183 = sadd.s32 %s179, 8
            %s184 = scalar_lea.sflag [#allocation4], %s183
            %186 = dma.done %s184, 16
          $region43: #{tpu_custom_call.1} parent=36 // pred_fallthru
            _
          %s187 = sadd.s32 %s163, %s168
          %s188 = sld [smem:[#allocation6 + %s187]]
          %s189 = scalar_lea.vmem %s2, %s188
          %s190 = scalar_lea.vmem [#allocation2], %s168
          %s191 = scalar_lea.sflag [#allocation4], %s173
          %p193 = scmp.lt.u32.totalorder 1, 8
          %p194 = pneg %p193
          // Predicated region
          $region44: #{tpu_custom_call.1} parent=36 // pred_check
            _
          $region45: #{tpu_custom_call.1} parent=36 // pred_check_branch
            %196 = sbr.rel (%p193) target = $region47
          $region46: #{tpu_custom_call.1} parent=36 // pred_region
            %s211 = sand.u32 1, 7
            %p212 = scmp.eq.s32.totalorder %s211, 0
            %p213 = pneg %p212
            // Predicated region
            $region59: #{tpu_custom_call.1} parent=46 // pred_check
              _
            $region60: #{tpu_custom_call.1} parent=46 // pred_check_branch
              %215 = sbr.rel (%p212) target = $region62
            $region61: #{tpu_custom_call.1} parent=46 // pred_region
              %s216 = sand.u32 1, 7
              %s217 = ssub.s32 1, %s216
              %s218 = scalar_lea.vmem %s189, %s217
              %s219 = ssub.s32 1, %s216
              %s220 = scalar_lea.vmem %s190, %s219 [#allocation2]
              %s221 = sshllo.u32 0, %s216
              loop: start=0, step=1, limit=1
              $region63: #{tpu_custom_call.1} parent=61 // loop_pre_header
                _
              $region64: #{tpu_custom_call.1} parent=61 // loop_header
                %s223 = sphi 0, %s227
                %p224 = scmp.ge.s32.totalorder %s223, 1
                %s228 = sphi %s218, %s218
                %s229 = sphi %s220, %s220
              $region65: #{tpu_custom_call.1} parent=61 // loop_header_branch
                %226 = sbr.rel (%p224) target = $region69
              $region66: #{tpu_custom_call.1} parent=61 // loop_body
                %v230 = vld [vmem:[%s228] sm:%s221]
                %231 = vst [vmem:[%s229] sm:%s221] %v230
              $region67: #{tpu_custom_call.1} parent=61 // loop_footer
                %s227 = sadd.s32 1, %s223
              $region68: #{tpu_custom_call.1} parent=61 // loop_footer_branch
                %222 = sbr.rel target = $region64
              $region69: #{tpu_custom_call.1} parent=61 // loop_exit
                _
            $region62: #{tpu_custom_call.1} parent=46 // pred_fallthru
              _
          $region47: #{tpu_custom_call.1} parent=36 // pred_fallthru
            _
          // Predicated region
          $region48: #{tpu_custom_call.1} parent=36 // pred_check
            %p197 = pneg %p193
          $region49: #{tpu_custom_call.1} parent=36 // pred_check_branch
            %199 = sbr.rel (%p197) target = $region51
          $region50: #{tpu_custom_call.1} parent=36 // pred_region
            %s200 = sshllo.u32 0, 1
            loop: start=0, step=1, limit=1
            $region52: #{tpu_custom_call.1} parent=50 // loop_pre_header
              _
            $region53: #{tpu_custom_call.1} parent=50 // loop_header
              %s202 = sphi 0, %s206
              %p203 = scmp.ge.s32.totalorder %s202, 1
              %s207 = sphi %s189, %s189
              %s208 = sphi %s190, %s190
            $region54: #{tpu_custom_call.1} parent=50 // loop_header_branch
              %205 = sbr.rel (%p203) target = $region58
            $region55: #{tpu_custom_call.1} parent=50 // loop_body
              %v209 = vld [vmem:[%s207] sm:%s200]
              %210 = vst [vmem:[%s208] sm:%s200] %v209
            $region56: #{tpu_custom_call.1} parent=50 // loop_footer
              %s206 = sadd.s32 1, %s202
            $region57: #{tpu_custom_call.1} parent=50 // loop_footer_branch
              %201 = sbr.rel target = $region53
            $region58: #{tpu_custom_call.1} parent=50 // loop_exit
              _
          $region51: #{tpu_custom_call.1} parent=36 // pred_fallthru
            _
          // Predicated region
          $region70: #{tpu_custom_call.1} parent=36 // pred_check
            _
          $region71: #{tpu_custom_call.1} parent=36 // pred_check_branch
            %234 = sbr.rel (0) target = $region73
          $region72: #{tpu_custom_call.1} parent=36 // pred_region
            %235 = vsyncadd %s191, 16
          $region73: #{tpu_custom_call.1} parent=36 // pred_fallthru
            _
          %s236 = sld [smem:[#allocation7 + %s187]]
          %s237 = scalar_lea.vmem %s3, %s236
          %s238 = scalar_lea.vmem [#allocation3], %s168
          %s239 = sadd.s32 %s173, 8
          %s240 = scalar_lea.sflag [#allocation4], %s239
          %p242 = scmp.lt.u32.totalorder 1, 8
          %p243 = pneg %p242
          // Predicated region
          $region74: #{tpu_custom_call.1} parent=36 // pred_check
            _
          $region75: #{tpu_custom_call.1} parent=36 // pred_check_branch
            %245 = sbr.rel (%p242) target = $region77
          $region76: #{tpu_custom_call.1} parent=36 // pred_region
            %s260 = sand.u32 1, 7
            %p261 = scmp.eq.s32.totalorder %s260, 0
            %p262 = pneg %p261
            // Predicated region
            $region89: #{tpu_custom_call.1} parent=76 // pred_check
              _
            $region90: #{tpu_custom_call.1} parent=76 // pred_check_branch
              %264 = sbr.rel (%p261) target = $region92
            $region91: #{tpu_custom_call.1} parent=76 // pred_region
              %s265 = sand.u32 1, 7
              %s266 = ssub.s32 1, %s265
              %s267 = scalar_lea.vmem %s237, %s266
              %s268 = ssub.s32 1, %s265
              %s269 = scalar_lea.vmem %s238, %s268 [#allocation3]
              %s270 = sshllo.u32 0, %s265
              loop: start=0, step=1, limit=1
              $region93: #{tpu_custom_call.1} parent=91 // loop_pre_header
                _
              $region94: #{tpu_custom_call.1} parent=91 // loop_header
                %s272 = sphi 0, %s276
                %p273 = scmp.ge.s32.totalorder %s272, 1
                %s277 = sphi %s267, %s267
                %s278 = sphi %s269, %s269
              $region95: #{tpu_custom_call.1} parent=91 // loop_header_branch
                %275 = sbr.rel (%p273) target = $region99
              $region96: #{tpu_custom_call.1} parent=91 // loop_body
                %v279 = vld [vmem:[%s277] sm:%s270]
                %280 = vst [vmem:[%s278] sm:%s270] %v279
              $region97: #{tpu_custom_call.1} parent=91 // loop_footer
                %s276 = sadd.s32 1, %s272
              $region98: #{tpu_custom_call.1} parent=91 // loop_footer_branch
                %271 = sbr.rel target = $region94
              $region99: #{tpu_custom_call.1} parent=91 // loop_exit
                _
            $region92: #{tpu_custom_call.1} parent=76 // pred_fallthru
              _
          $region77: #{tpu_custom_call.1} parent=36 // pred_fallthru
            _
          // Predicated region
          $region78: #{tpu_custom_call.1} parent=36 // pred_check
            %p246 = pneg %p242
          $region79: #{tpu_custom_call.1} parent=36 // pred_check_branch
            %248 = sbr.rel (%p246) target = $region81
          $region80: #{tpu_custom_call.1} parent=36 // pred_region
            %s249 = sshllo.u32 0, 1
            loop: start=0, step=1, limit=1
            $region82: #{tpu_custom_call.1} parent=80 // loop_pre_header
              _
            $region83: #{tpu_custom_call.1} parent=80 // loop_header
              %s251 = sphi 0, %s255
              %p252 = scmp.ge.s32.totalorder %s251, 1
              %s256 = sphi %s237, %s237
              %s257 = sphi %s238, %s238
            $region84: #{tpu_custom_call.1} parent=80 // loop_header_branch
              %254 = sbr.rel (%p252) target = $region88
            $region85: #{tpu_custom_call.1} parent=80 // loop_body
              %v258 = vld [vmem:[%s256] sm:%s249]
              %259 = vst [vmem:[%s257] sm:%s249] %v258
            $region86: #{tpu_custom_call.1} parent=80 // loop_footer
              %s255 = sadd.s32 1, %s251
            $region87: #{tpu_custom_call.1} parent=80 // loop_footer_branch
              %250 = sbr.rel target = $region83
            $region88: #{tpu_custom_call.1} parent=80 // loop_exit
              _
          $region81: #{tpu_custom_call.1} parent=36 // pred_fallthru
            _
          // Predicated region
          $region100: #{tpu_custom_call.1} parent=36 // pred_check
            _
          $region101: #{tpu_custom_call.1} parent=36 // pred_check_branch
            %283 = sbr.rel (0) target = $region103
          $region102: #{tpu_custom_call.1} parent=36 // pred_region
            %284 = vsyncadd %s240, 16
          $region103: #{tpu_custom_call.1} parent=36 // pred_fallthru
            _
        $region37: #{tpu_custom_call.1} parent=31 // loop_footer
          %s170 = sadd.s32 %s168, 1
        $region38: #{tpu_custom_call.1} parent=31 // loop_footer_branch
          %167 = sbr.rel target = $region34
        $region39: #{tpu_custom_call.1} parent=31 // loop_exit
          _
        %p285 = scmp.lt.s32.totalorder %s166, 8
        %s286 = scalar_select %p285, %s166, 8
        // While loop
        $region104: #{tpu_custom_call.1} parent=31 // loop_pre_header
          _
        $region105: #{tpu_custom_call.1} parent=31 // loop_header
          %s288 = sphi 0, %s290
          %p289 = scmp.ge.s32.totalorder %s288, %s286
        $region106: #{tpu_custom_call.1} parent=31 // loop_header_branch
          %292 = sbr.rel (%p289) target = $region110
        $region107: #{tpu_custom_call.1} parent=31 // loop_body
          %s293 = ssub.s32 %s166, 1
          %s294 = ssub.s32 %s293, %s288
          %s295 = sand.u32 %s294, 7
          %s296 = scalar_lea.sflag [#allocation4], %s295
          %298 = dma.done %s296, 16
          %s299 = sadd.s32 %s295, 8
          %s300 = scalar_lea.sflag [#allocation4], %s299
          %302 = dma.done %s300, 16
        $region108: #{tpu_custom_call.1} parent=31 // loop_footer
          %s290 = sadd.s32 %s288, 1
        $region109: #{tpu_custom_call.1} parent=31 // loop_footer_branch
          %287 = sbr.rel target = $region105
        $region110: #{tpu_custom_call.1} parent=31 // loop_exit
          _
        %v303 = vld [vmem:[%s4] sm:$0x1]
        %v304 = vld [vmem:[#allocation2] sm:$0xff]
        %v305 = vld [vmem:[#allocation2 + $0x8] sm:$0xff]
        %v306 = vld [vmem:[#allocation2 + $0x10] sm:$0xff]
        %v307 = vld [vmem:[#allocation2 + $0x18] sm:$0xff]
        %v308 = vld [vmem:[#allocation2 + $0x20] sm:$0xff]
        %v309 = vld [vmem:[#allocation2 + $0x28] sm:$0xff]
        %v310 = vld [vmem:[#allocation2 + $0x30] sm:$0xff]
        %v311 = vld [vmem:[#allocation2 + $0x38] sm:$0xff]
        %v312 = vld [vmem:[#allocation2 + $0x40] sm:$0xff]
        %v313 = vld [vmem:[#allocation2 + $0x48] sm:$0xff]
        %v314 = vld [vmem:[#allocation2 + $0x50] sm:$0xff]
        %v315 = vld [vmem:[#allocation2 + $0x58] sm:$0xff]
        %v316 = vld [vmem:[#allocation2 + $0x60] sm:$0xff]
        %v317 = vld [vmem:[#allocation2 + $0x68] sm:$0xff]
        %v318 = vld [vmem:[#allocation2 + $0x70] sm:$0xff]
        %v319 = vld [vmem:[#allocation2 + $0x78] sm:$0xff]
        %v320 = vld [vmem:[%s5] sm:$0x1]
        %v321 = vld [vmem:[#allocation3] sm:$0xff]
        %v322 = vld [vmem:[#allocation3 + $0x8] sm:$0xff]
        %v323 = vld [vmem:[#allocation3 + $0x10] sm:$0xff]
        %v324 = vld [vmem:[#allocation3 + $0x18] sm:$0xff]
        %v325 = vld [vmem:[#allocation3 + $0x20] sm:$0xff]
        %v326 = vld [vmem:[#allocation3 + $0x28] sm:$0xff]
        %v327 = vld [vmem:[#allocation3 + $0x30] sm:$0xff]
        %v328 = vld [vmem:[#allocation3 + $0x38] sm:$0xff]
        %v329 = vld [vmem:[#allocation3 + $0x40] sm:$0xff]
        %v330 = vld [vmem:[#allocation3 + $0x48] sm:$0xff]
        %v331 = vld [vmem:[#allocation3 + $0x50] sm:$0xff]
        %v332 = vld [vmem:[#allocation3 + $0x58] sm:$0xff]
        %v333 = vld [vmem:[#allocation3 + $0x60] sm:$0xff]
        %v334 = vld [vmem:[#allocation3 + $0x68] sm:$0xff]
        %v335 = vld [vmem:[#allocation3 + $0x70] sm:$0xff]
        %v336 = vld [vmem:[#allocation3 + $0x78] sm:$0xff]
        %vm337 = vcmask 261120
        %v339 = vsel %vm337, %v320, 0
        %v342 = vsel %vm337, %v321, 0
        %v345 = vsel %vm337, %v322, 0
        %v348 = vsel %vm337, %v323, 0
        %v351 = vsel %vm337, %v324, 0
        %v354 = vsel %vm337, %v325, 0
        %v357 = vsel %vm337, %v326, 0
        %v360 = vsel %vm337, %v327, 0
        %v363 = vsel %vm337, %v328, 0
        %v366 = vsel %vm337, %v329, 0
        %v369 = vsel %vm337, %v330, 0
        %v372 = vsel %vm337, %v331, 0
        %v375 = vsel %vm337, %v332, 0
        %v378 = vsel %vm337, %v333, 0
        %v381 = vsel %vm337, %v334, 0
        %v384 = vsel %vm337, %v335, 0
        %v387 = vsel %vm337, %v336, 0
        %389 = vmatprep.subr.mxu0 0.0
        %390 = vmatpush1.xpose.msra.mxu0 %v342
        %391 = vmatprep.subr.mxu0 0.0
        %392 = vmatpush1.xpose.msra.mxu0 %v345
        %393 = vmatprep.subr.mxu0 0.0
        %394 = vmatpush1.xpose.msra.mxu0 %v348
        %395 = vmatprep.subr.mxu0 0.0
        %396 = vmatpush1.xpose.msra.mxu0 %v351
        %397 = vmatprep.subr.mxu0 0.0
        %398 = vmatpush1.xpose.msra.mxu0 %v354
        %399 = vmatprep.subr.mxu0 0.0
        %400 = vmatpush1.xpose.msra.mxu0 %v357
        %401 = vmatprep.subr.mxu0 0.0
        %402 = vmatpush1.xpose.msra.mxu0 %v360
        %403 = vmatprep.subr.mxu0 0.0
        %404 = vmatpush1.xpose.msra.mxu0 %v363
        %405 = vmatprep.subr.mxu0 0.0
        %406 = vmatpush1.xpose.msra.mxu0 %v366
        %407 = vmatprep.subr.mxu0 0.0
        %408 = vmatpush1.xpose.msra.mxu0 %v369
        %409 = vmatprep.subr.mxu0 0.0
        %410 = vmatpush1.xpose.msra.mxu0 %v372
        %411 = vmatprep.subr.mxu0 0.0
        %412 = vmatpush1.xpose.msra.mxu0 %v375
        %413 = vmatprep.subr.mxu0 0.0
        %414 = vmatpush1.xpose.msra.mxu0 %v378
        %415 = vmatprep.subr.mxu0 0.0
        %416 = vmatpush1.xpose.msra.mxu0 %v381
        %417 = vmatprep.subr.mxu0 0.0
        %418 = vmatpush1.xpose.msra.mxu0 %v384
        %419 = vmatprep.subr.mxu0 0.0
        %420 = vmatpush1.xpose.msra.mxu0 %v387
        %421 = vmatprep.subr.mxu0 0.0
        %422 = vmatpush1.xpose.msra.mxu0 0.0
        %423 = vmatprep.subr.mxu0 0.0
        %424 = vmatpush1.xpose.msra.mxu0 0.0
        %425 = vmatprep.subr.mxu0 0.0
        %426 = vmatpush1.xpose.msra.mxu0 0.0
        %427 = vmatprep.subr.mxu0 0.0
        %428 = vmatpush1.xpose.msra.mxu0 0.0
        %429 = vmatprep.subr.mxu0 0.0
        %430 = vmatpush1.xpose.msra.mxu0 0.0
        %431 = vmatprep.subr.mxu0 0.0
        %432 = vmatpush1.xpose.msra.mxu0 0.0
        %433 = vmatprep.subr.mxu0 0.0
        %434 = vmatpush1.xpose.msra.mxu0 0.0
        %435 = vmatprep.subr.mxu0 0.0
        %436 = vmatpush1.xpose.msra.mxu0 0.0
        %437 = vmatprep.subr.mxu0 0.0
        %438 = vmatpush1.xpose.msra.mxu0 0.0
        %439 = vmatprep.subr.mxu0 0.0
        %440 = vmatpush1.xpose.msra.mxu0 0.0
        %441 = vmatprep.subr.mxu0 0.0
        %442 = vmatpush1.xpose.msra.mxu0 0.0
        %443 = vmatprep.subr.mxu0 0.0
        %444 = vmatpush1.xpose.msra.mxu0 0.0
        %445 = vmatprep.subr.mxu0 0.0
        %446 = vmatpush1.xpose.msra.mxu0 0.0
        %447 = vmatprep.subr.mxu0 0.0
        %448 = vmatpush1.xpose.msra.mxu0 0.0
        %449 = vmatprep.subr.mxu0 0.0
        %450 = vmatpush1.xpose.msra.mxu0 0.0
        %451 = vmatprep.subr.mxu0 0.0
        %452 = vmatpush1.xpose.msra.mxu0 0.0
        %453 = vmatprep.mubr.f32.mxu0 0.0
        %454 = vmatmul.mubr.f32.gmra.mrb[0].mxu0 %v339
        %v455 = vpop.f32.mrb[0].mxu0
        %v456 = vadd.f32 0.0, %v455
        %v457 = vpop.f32.mrb[0].mxu0
        %458 = vdwg.mxu0
        %v460 = vsel %vm337, %v303, 0
        %v463 = vsel %vm337, %v304, 0
        %v466 = vsel %vm337, %v305, 0
        %v469 = vsel %vm337, %v306, 0
        %v472 = vsel %vm337, %v307, 0
        %v475 = vsel %vm337, %v308, 0
        %v478 = vsel %vm337, %v309, 0
        %v481 = vsel %vm337, %v310, 0
        %v484 = vsel %vm337, %v311, 0
        %v487 = vsel %vm337, %v312, 0
        %v490 = vsel %vm337, %v313, 0
        %v493 = vsel %vm337, %v314, 0
        %v496 = vsel %vm337, %v315, 0
        %v499 = vsel %vm337, %v316, 0
        %v502 = vsel %vm337, %v317, 0
        %v505 = vsel %vm337, %v318, 0
        %v508 = vsel %vm337, %v319, 0
        %510 = vmatprep.subr.mxu0 0.0
        %511 = vmatpush1.xpose.msra.mxu0 %v463
        %512 = vmatprep.subr.mxu0 0.0
        %513 = vmatpush1.xpose.msra.mxu0 %v466
        %514 = vmatprep.subr.mxu0 0.0
        %515 = vmatpush1.xpose.msra.mxu0 %v469
        %516 = vmatprep.subr.mxu0 0.0
        %517 = vmatpush1.xpose.msra.mxu0 %v472
        %518 = vmatprep.subr.mxu0 0.0
        %519 = vmatpush1.xpose.msra.mxu0 %v475
        %520 = vmatprep.subr.mxu0 0.0
        %521 = vmatpush1.xpose.msra.mxu0 %v478
        %522 = vmatprep.subr.mxu0 0.0
        %523 = vmatpush1.xpose.msra.mxu0 %v481
        %524 = vmatprep.subr.mxu0 0.0
        %525 = vmatpush1.xpose.msra.mxu0 %v484
        %526 = vmatprep.subr.mxu0 0.0
        %527 = vmatpush1.xpose.msra.mxu0 %v487
        %528 = vmatprep.subr.mxu0 0.0
        %529 = vmatpush1.xpose.msra.mxu0 %v490
        %530 = vmatprep.subr.mxu0 0.0
        %531 = vmatpush1.xpose.msra.mxu0 %v493
        %532 = vmatprep.subr.mxu0 0.0
        %533 = vmatpush1.xpose.msra.mxu0 %v496
        %534 = vmatprep.subr.mxu0 0.0
        %535 = vmatpush1.xpose.msra.mxu0 %v499
        %536 = vmatprep.subr.mxu0 0.0
        %537 = vmatpush1.xpose.msra.mxu0 %v502
        %538 = vmatprep.subr.mxu0 0.0
        %539 = vmatpush1.xpose.msra.mxu0 %v505
        %540 = vmatprep.subr.mxu0 0.0
        %541 = vmatpush1.xpose.msra.mxu0 %v508
        %542 = vmatprep.subr.mxu0 0.0
        %543 = vmatpush1.xpose.msra.mxu0 0.0
        %544 = vmatprep.subr.mxu0 0.0
        %545 = vmatpush1.xpose.msra.mxu0 0.0
        %546 = vmatprep.subr.mxu0 0.0
        %547 = vmatpush1.xpose.msra.mxu0 0.0
        %548 = vmatprep.subr.mxu0 0.0
        %549 = vmatpush1.xpose.msra.mxu0 0.0
        %550 = vmatprep.subr.mxu0 0.0
        %551 = vmatpush1.xpose.msra.mxu0 0.0
        %552 = vmatprep.subr.mxu0 0.0
        %553 = vmatpush1.xpose.msra.mxu0 0.0
        %554 = vmatprep.subr.mxu0 0.0
        %555 = vmatpush1.xpose.msra.mxu0 0.0
        %556 = vmatprep.subr.mxu0 0.0
        %557 = vmatpush1.xpose.msra.mxu0 0.0
        %558 = vmatprep.subr.mxu0 0.0
        %559 = vmatpush1.xpose.msra.mxu0 0.0
        %560 = vmatprep.subr.mxu0 0.0
        %561 = vmatpush1.xpose.msra.mxu0 0.0
        %562 = vmatprep.subr.mxu0 0.0
        %563 = vmatpush1.xpose.msra.mxu0 0.0
        %564 = vmatprep.subr.mxu0 0.0
        %565 = vmatpush1.xpose.msra.mxu0 0.0
        %566 = vmatprep.subr.mxu0 0.0
        %567 = vmatpush1.xpose.msra.mxu0 0.0
        %568 = vmatprep.subr.mxu0 0.0
        %569 = vmatpush1.xpose.msra.mxu0 0.0
        %570 = vmatprep.subr.mxu0 0.0
        %571 = vmatpush1.xpose.msra.mxu0 0.0
        %572 = vmatprep.subr.mxu0 0.0
        %573 = vmatpush1.xpose.msra.mxu0 0.0
        %574 = vmatprep.mubr.f32.mxu0 0.0
        %575 = vmatmul.mubr.f32.gmra.mrb[0].mxu0 %v460
        %v576 = vpop.f32.mrb[0].mxu0
        %v577 = vadd.f32 %v456, %v576
        %v578 = vpop.f32.mrb[0].mxu0
        %579 = vdwg.mxu0
        %s580 = sld [smem:[#allocation8]]
        %v581 = vstv %s580
        %v582 = vadd.f32 %v577, %v581
        %v583 = vlaneseq
        %v584 = vand.u32 %v583, 127
        %v585 = vstv %s166
        %vm586 = vcmp.lt.s32.totalorder %v584, %v585
        %v587 = vsel %vm586, %v582, 0.0
        %588 = vst [vmem:[%s162] sm:$0x1] %v587
        %s589 = sand.u32 %s103, 1
        %s590 = scalar_lea.sflag [#allocation10], %s589
        %s591 = sand.u32 %s103, 1
        %s592 = scalar_lea.vmem [#allocation9], %s591
        // Predicated region
        $region111: #{tpu_custom_call.1} parent=31 // pred_check
          %p593 = pneg %p113
        $region112: #{tpu_custom_call.1} parent=31 // pred_check_branch
          %595 = sbr.rel (%p593) target = $region114
        $region113: #{tpu_custom_call.1} parent=31 // pred_region
          %s597 = ssub.s32 16, 16
          %598 = vsyncadd %s590, %s597
          %s599 = smul.addr %s32, 16
          %s600 = scalar_lea.hbm %s7, %s599
          %s602 = sshll.u32 %s592, 4
          %s603 = int_to_ptr.vmem [resolvable:$true] %s602
          %605 = dma.vmem_to_hbm [thread:$0]  %s603, 16, %s600, %s590
        $region114: #{tpu_custom_call.1} parent=31 // pred_fallthru
          _
      $region32: #{tpu_custom_call.1} parent=5 // pred_fallthru
        _
      %p606 = scmp.le.s32.totalorder 2, %s27
      // Predicated region
      $region115: #{tpu_custom_call.1} parent=5 // pred_check
        %p607 = pneg %p606
      $region116: #{tpu_custom_call.1} parent=5 // pred_check_branch
        %609 = sbr.rel (%p607) target = $region118
      $region117: #{tpu_custom_call.1} parent=5 // pred_region
        %s610 = ssub.s32 %s27, 2
        // Predicated region
        $region119: #{tpu_custom_call.1} parent=117 // pred_check
          %p611 = pneg %p119
        $region120: #{tpu_custom_call.1} parent=117 // pred_check_branch
          %613 = sbr.rel (%p611) target = $region122
        $region121: #{tpu_custom_call.1} parent=117 // pred_region
          %s614 = sand.u32 %s104, 1
          %s615 = scalar_lea.sflag [#allocation10], %s614
          %s616 = sand.u32 %s104, 1
          %s617 = scalar_lea.vmem [#allocation9], %s616
          %618 = dma.done %s615, 16
        $region122: #{tpu_custom_call.1} parent=117 // pred_fallthru
          _
      $region118: #{tpu_custom_call.1} parent=5 // pred_fallthru
        _
    $region6: #{tpu_custom_call.1} parent=1 // loop_footer
      %s31 = sadd.s32 1, %s27
    $region7: #{tpu_custom_call.1} parent=1 // loop_footer_branch
      %26 = sbr.rel target = $region3
    $region8: #{tpu_custom_call.1} parent=1 // loop_exit
      _
    %619 = vsyncpa [#allocation10], 1
    %s620 = scalar_lea.sflag [#allocation10], 1
    %621 = vsyncpa %s620, 1
  %622 = vsyncmov [#allocation4]
  %s623 = vpop.sfrf %622
  %p624 = scmp.eq.s32.totalorder %s623, 0
  %p625 = pneg %p624
  %627 = shalt.err (%p625)
  %s628 = scalar_lea.sflag [#allocation4], 1
  %629 = vsyncmov %s628
  %s630 = vpop.sfrf %629
  %p631 = scmp.eq.s32.totalorder %s630, 0
  %p632 = pneg %p631
  %634 = shalt.err (%p632)
  %s635 = scalar_lea.sflag [#allocation4], 2
  %636 = vsyncmov %s635
  %s637 = vpop.sfrf %636
  %p638 = scmp.eq.s32.totalorder %s637, 0
  %p639 = pneg %p638
  %641 = shalt.err (%p639)
  %s642 = scalar_lea.sflag [#allocation4], 3
  %643 = vsyncmov %s642
  %s644 = vpop.sfrf %643
  %p645 = scmp.eq.s32.totalorder %s644, 0
  %p646 = pneg %p645
  %648 = shalt.err (%p646)
  %s649 = scalar_lea.sflag [#allocation4], 4
  %650 = vsyncmov %s649
  %s651 = vpop.sfrf %650
  %p652 = scmp.eq.s32.totalorder %s651, 0
  %p653 = pneg %p652
  %655 = shalt.err (%p653)
  %s656 = scalar_lea.sflag [#allocation4], 5
  %657 = vsyncmov %s656
  %s658 = vpop.sfrf %657
  %p659 = scmp.eq.s32.totalorder %s658, 0
  %p660 = pneg %p659
  %662 = shalt.err (%p660)
  %s663 = scalar_lea.sflag [#allocation4], 6
  %664 = vsyncmov %s663
  %s665 = vpop.sfrf %664
  %p666 = scmp.eq.s32.totalorder %s665, 0
  %p667 = pneg %p666
  %669 = shalt.err (%p667)
  %s670 = scalar_lea.sflag [#allocation4], 7
  %671 = vsyncmov %s670
  %s672 = vpop.sfrf %671
  %p673 = scmp.eq.s32.totalorder %s672, 0
  %p674 = pneg %p673
  %676 = shalt.err (%p674)
  %s677 = scalar_lea.sflag [#allocation4], 8
  %678 = vsyncmov %s677
  %s679 = vpop.sfrf %678
  %p680 = scmp.eq.s32.totalorder %s679, 0
  %p681 = pneg %p680
  %683 = shalt.err (%p681)
  %s684 = scalar_lea.sflag [#allocation4], 9
  %685 = vsyncmov %s684
  %s686 = vpop.sfrf %685
  %p687 = scmp.eq.s32.totalorder %s686, 0
  %p688 = pneg %p687
  %690 = shalt.err (%p688)
  %s691 = scalar_lea.sflag [#allocation4], 10
  %692 = vsyncmov %s691
  %s693 = vpop.sfrf %692
  %p694 = scmp.eq.s32.totalorder %s693, 0
  %p695 = pneg %p694
  %697 = shalt.err (%p695)
  %s698 = scalar_lea.sflag [#allocation4], 11
  %699 = vsyncmov %s698
  %s700 = vpop.sfrf %699
  %p701 = scmp.eq.s32.totalorder %s700, 0
  %p702 = pneg %p701
  %704 = shalt.err (%p702)
  %s705 = scalar_lea.sflag [#allocation4], 12
  %706 = vsyncmov %s705
  %s707 = vpop.sfrf %706
  %p708 = scmp.eq.s32.totalorder %s707, 0
  %p709 = pneg %p708
  %711 = shalt.err (%p709)
  %s712 = scalar_lea.sflag [#allocation4], 13
  %713 = vsyncmov %s712
  %s714 = vpop.sfrf %713
  %p715 = scmp.eq.s32.totalorder %s714, 0
  %p716 = pneg %p715
  %718 = shalt.err (%p716)
  %s719 = scalar_lea.sflag [#allocation4], 14
  %720 = vsyncmov %s719
  %s721 = vpop.sfrf %720
  %p722 = scmp.eq.s32.totalorder %s721, 0
  %p723 = pneg %p722
  %725 = shalt.err (%p723)
  %s726 = scalar_lea.sflag [#allocation4], 15
  %727 = vsyncmov %s726
  %s728 = vpop.sfrf %727
  %p729 = scmp.eq.s32.totalorder %s728, 0
  %p730 = pneg %p729
  %732 = shalt.err (%p730)

</llo_original>
